<compile_context>
chip_gen: v7x
topology: tpu7x:2x2x1
jax: 0.10.0
libtpu: 0.0.40
codegen_flags: <defaults>
</compile_context>

<pallas_src>
import functools

import jax
import jax.numpy as jnp
from jax import lax
from jax.experimental import pallas as pl
from jax.experimental.pallas import tpu as pltpu


def _round_up(x, m):
    return (x + m - 1) // m * m


# ----------------------------------------------------------------------------
# Kernels
# ----------------------------------------------------------------------------
def _linear_single_k_kernel(x_ref, w_ref, b_ref, o_ref, *, fuse_softmax):
    # x_ref: (tm, K)  w_ref: (tn, K)  b_ref: (1, tn)  o_ref: (tm, tn)
    y = lax.dot_general(
        x_ref[...], w_ref[...],
        dimension_numbers=(((1,), (1,)), ((), ())),   # x @ w.T, native layout
        preferred_element_type=jnp.float32,
    )
    y = y + b_ref[...].astype(jnp.float32)
    if fuse_softmax:
        # Only used when tn == D_out (full row in this tile) -> exact softmax.
        y = y - jnp.max(y, axis=-1, keepdims=True)
        e = jnp.exp(y)
        y = e / jnp.sum(e, axis=-1, keepdims=True)
    o_ref[...] = y.astype(o_ref.dtype)


def _linear_multi_k_kernel(x_ref, w_ref, b_ref, o_ref, acc_ref, *, fuse_softmax):
    # Used only when D_in is large enough to need K tiling.
    k = pl.program_id(2)

    @pl.when(k == 0)
    def _init():
        acc_ref[...] = jnp.zeros_like(acc_ref)

    acc_ref[...] += lax.dot_general(
        x_ref[...], w_ref[...],
        dimension_numbers=(((1,), (1,)), ((), ())),
        preferred_element_type=jnp.float32,
    )

    @pl.when(k == pl.num_programs(2) - 1)
    def _finalize():
        y = acc_ref[...] + b_ref[...].astype(jnp.float32)
        if fuse_softmax:
            y = y - jnp.max(y, axis=-1, keepdims=True)
            e = jnp.exp(y)
            y = e / jnp.sum(e, axis=-1, keepdims=True)
        o_ref[...] = y.astype(o_ref.dtype)


def _softmax_kernel(y_ref, o_ref):
    # y_ref / o_ref: (tm_s, D_out) -- full row per tile, exact softmax.
    y = y_ref[...].astype(jnp.float32)
    m = jnp.max(y, axis=-1, keepdims=True)
    e = jnp.exp(y - m)
    o_ref[...] = (e / jnp.sum(e, axis=-1, keepdims=True)).astype(o_ref.dtype)


# ----------------------------------------------------------------------------
# Wrappers
# ----------------------------------------------------------------------------
_VMEM_BUDGET = 24 * 1024 * 1024    # keep double-buffered tiles under v7x scoped default
_MAX_TK = 2048                     # single-K-block cutoff (reduction stays in one step)
_MAX_TN_SINGLE = 1024              # single-N-tile (and softmax-fusable) cutoff
_TN_DEFAULT = 512                  # 256-multiple for v6e/v7x MXU geometry
_TM_DEFAULT = 512                  # bigger tm => weight streamed from HBM fewer times


def _linear(x, weight, bias, *, fuse_softmax=False):
    """x: (B, D_in); weight: (D_out, D_in) (nn.Linear layout); bias: (D_out,)."""
    B, D_in = x.shape
    D_out, D_in_w = weight.shape
    assert D_in == D_in_w, "weight shape mismatch"
    itemsize = jnp.dtype(x.dtype).itemsize

    # ---- K (reduction): single tile when it fits, else 128/256-multiple tiles.
    if D_in <= _MAX_TK:
        tk, Kp = D_in, D_in                      # full-dim block, no pad, no K grid axis
    else:
        Kp = _round_up(D_in, 128)
        tk = next(c for c in (2048, 1024, 512, 256, 128) if Kp % c == 0)
    grid_k = Kp // tk

    # ---- N: never padded (ragged tail writes are masked); full-dim tile when small.
    if D_out <= _MAX_TN_SINGLE:
        tn = D_out
    else:
        tn = _TN_DEFAULT
    grid_n = pl.cdiv(D_out, tn)
    fuse_softmax = fuse_softmax and grid_n == 1   # softmax needs the full row in-tile

    # ---- M: as large as the VMEM budget allows (weight re-read ceil(B/tm) times).
    def _ws(tm_):
        acc = tm_ * tn * 4 if grid_k > 1 else 0
        return 2 * (tm_ * tk + tn * tk + tm_ * tn + tn) * itemsize + acc

    tm = _TM_DEFAULT
    while tm > 128 and _ws(tm) > _VMEM_BUDGET:
        tm //= 2
    if B <= tm:
        tm = B                                    # full-dim block: no ragged tail
    grid_m = pl.cdiv(B, tm)

    # ---- Pad ONLY the K tail (M/N tails are safe ragged; K garbage is not).
    x_in = x if Kp == D_in else jnp.pad(x, ((0, 0), (0, Kp - D_in)))
    w_in = weight if Kp == D_in else jnp.pad(weight, ((0, 0), (0, Kp - D_in)))
    b_in = bias.reshape(1, D_out)

    vmem_limit = int(min(max(_ws(tm) * 1.3, 16 * 1024 * 1024), 64 * 1024 * 1024))

    if grid_k == 1:
        kernel = functools.partial(_linear_single_k_kernel, fuse_softmax=fuse_softmax)
        grid = (grid_m, grid_n)
        in_specs = [
            pl.BlockSpec((tm, tk), lambda i, j: (i, 0)),   # x tile
            pl.BlockSpec((tn, tk), lambda i, j: (j, 0)),   # weight tile (native layout)
            pl.BlockSpec((1, tn), lambda i, j: (0, j)),    # bias tile (per-N)
        ]
        out_specs = pl.BlockSpec((tm, tn), lambda i, j: (i, j))
        scratch_shapes = []
        dims = ("parallel", "parallel")
    else:
        kernel = functools.partial(_linear_multi_k_kernel, fuse_softmax=fuse_softmax)
        grid = (grid_m, grid_n, grid_k)                    # K (reduction) last
        in_specs = [
            pl.BlockSpec((tm, tk), lambda i, j, k: (i, k)),
            pl.BlockSpec((tn, tk), lambda i, j, k: (j, k)),
            pl.BlockSpec((1, tn), lambda i, j, k: (0, j)),
        ]
        out_specs = pl.BlockSpec((tm, tn), lambda i, j, k: (i, j))
        scratch_shapes = [pltpu.VMEM((tm, tn), jnp.float32)]
        dims = ("parallel", "parallel", "arbitrary")

    return pl.pallas_call(
        kernel,
        out_shape=jax.ShapeDtypeStruct((B, D_out), x.dtype),
        grid_spec=pltpu.PrefetchScalarGridSpec(
            num_scalar_prefetch=0,
            grid=grid,
            in_specs=in_specs,
            out_specs=out_specs,
            scratch_shapes=scratch_shapes,
        ),
        compiler_params=pltpu.CompilerParams(
            dimension_semantics=dims,
            vmem_limit_bytes=vmem_limit,
        ),
    )(x_in, w_in, b_in)


def _softmax(y):
    """Row-wise softmax over the last dim; only used when D_out > one N tile."""
    B, D_out = y.shape
    itemsize = jnp.dtype(y.dtype).itemsize
    budget = 16 * 1024 * 1024
    # in + out, double-buffered, full-row blocks: 4 * tm * D_out * itemsize bytes.
    tm = max(8, min(256, (budget // (4 * D_out * itemsize)) // 8 * 8))
    if B <= tm:
        tm = B
    vmem_limit = int(min(max(4 * tm * D_out * itemsize * 1.3, 16 * 1024 * 1024),
                         64 * 1024 * 1024))
    # TODO(synk): for very large D_out (>~100K vocab) switch to a two-pass/online
    # softmax tiled over D_out (or emit per-row max/sum from the matmul pass).
    return pl.pallas_call(
        _softmax_kernel,
        out_shape=jax.ShapeDtypeStruct((B, D_out), y.dtype),
        grid_spec=pltpu.PrefetchScalarGridSpec(
            num_scalar_prefetch=0,
            grid=(pl.cdiv(B, tm),),
            in_specs=[pl.BlockSpec((tm, D_out), lambda i: (i, 0))],
            out_specs=pl.BlockSpec((tm, D_out), lambda i: (i, 0)),
        ),
        compiler_params=pltpu.CompilerParams(
            dimension_semantics=("parallel",),
            vmem_limit_bytes=vmem_limit,
        ),
    )(y)


def output_head(x, weight, bias, activation=None):
    """
    Forward pass of OutputHead:
        y = x @ weight.T + bias      (weight kept in PyTorch nn.Linear layout)
        y = activation(y)            (optional; 'softmax' supported)
    """
    if activation not in (None, "softmax"):
        raise NotImplementedError(f"unsupported activation: {activation!r}")
    want_softmax = activation == "softmax"
    fuse = want_softmax and weight.shape[0] <= _MAX_TN_SINGLE
    y = _linear(x, weight, bias, fuse_softmax=fuse)
    if want_softmax and not fuse:
        y = _softmax(y)
    return y


if __name__ == "__main__":
    key = jax.random.PRNGKey(0)
    k_x, k_w, k_b = jax.random.split(key, 3)

    batch, input_dim, output_dim = 2, 32, 16

    x = jax.random.normal(k_x, (batch, input_dim), dtype=jnp.float32)
    # Deterministic init mimicking nn.Linear's uniform(-1/sqrt(fan_in), 1/sqrt(fan_in))
    bound = 1.0 / jnp.sqrt(jnp.float32(input_dim))
    weight = jax.random.uniform(k_w, (output_dim, input_dim), jnp.float32, -bound, bound)
    bias = jax.random.uniform(k_b, (output_dim,), jnp.float32, -bound, bound)

    # Default module config: activation=None
    out = jax.block_until_ready(output_head(x, weight, bias, activation=None))
    ref = x @ weight.T + bias
    assert out.shape == (batch, output_dim)
    assert jnp.allclose(out, ref, atol=1e-5, rtol=1e-5), "linear mismatch vs reference"

    # Optional softmax activation path (fused into the matmul epilogue here).
    out_sm = jax.block_until_ready(output_head(x, weight, bias, activation="softmax"))
    ref_sm = jax.nn.softmax(ref, axis=-1)
    assert jnp.allclose(out_sm, ref_sm, atol=1e-4, rtol=1e-4), "softmax mismatch vs reference"

    print("KERNEL_OK")
</pallas_src>

<mosaic_0001>
module attributes {stable_mosaic.version = 11 : i64} {
  func.func @_linear_single_k_kernel(%arg0: i32, %arg1: i32, %arg2: memref<2x32xf32, #tpu.memory_space<vmem>>, %arg3: memref<16x32xf32, #tpu.memory_space<vmem>>, %arg4: memref<1x16xf32, #tpu.memory_space<vmem>>, %arg5: memref<2x16xf32, #tpu.memory_space<vmem>>) attributes {dimension_semantics = [#tpu.dimension_semantics<parallel>, #tpu.dimension_semantics<parallel>], iteration_bounds = array<i64: 1, 1>, scalar_prefetch = 0 : i64, scratch_operands = 0 : i64, tpu.core_type = #tpu.core_type<tc>, window_params = [{transform_indices = @transform_0, window_bounds = array<i64: 2, 32>}, {transform_indices = @transform_1, window_bounds = array<i64: 16, 32>}, {transform_indices = @transform_2, window_bounds = array<i64: 1, 16>}, {transform_indices = @transform_3, window_bounds = array<i64: 2, 16>}]} {
    %c0 = arith.constant 0 : index
    %c0_0 = arith.constant 0 : index
    %0 = vector.load %arg2[%c0, %c0_0] : memref<2x32xf32, #tpu.memory_space<vmem>>, vector<2x32xf32>
    %c0_1 = arith.constant 0 : index
    %c0_2 = arith.constant 0 : index
    %1 = vector.load %arg3[%c0_1, %c0_2] : memref<16x32xf32, #tpu.memory_space<vmem>>, vector<16x32xf32>
    %cst = arith.constant dense<0.000000e+00> : vector<2x16xf32>
    %2 = tpu.matmul %0, %1, %cst {dimension_numbers = #tpu.dot_dimension_numbers<[1], [1], [0], [0], [0, 0, 1, 0], [], []>} : vector<2x32xf32>, vector<16x32xf32>, vector<2x16xf32> -> vector<2x16xf32>
    %c0_3 = arith.constant 0 : index
    %c0_4 = arith.constant 0 : index
    %3 = vector.load %arg4[%c0_3, %c0_4] : memref<1x16xf32, #tpu.memory_space<vmem>>, vector<1x16xf32>
    %4 = vector.broadcast %3 : vector<1x16xf32> to vector<2x16xf32>
    %5 = arith.addf %2, %4 : vector<2x16xf32>
    %c0_5 = arith.constant 0 : index
    %c0_6 = arith.constant 0 : index
    %6 = vector.load %arg5[%c0_5, %c0_6] : memref<2x16xf32, #tpu.memory_space<vmem>>, vector<2x16xf32>
    tpu.vector_store %arg5[%c0_5, %c0_6], %5 {strides = array<i32>} : memref<2x16xf32, #tpu.memory_space<vmem>>, vector<2x16xf32>,
    return
  }
  func.func @transform_0(%arg0: i32, %arg1: i32) -> (i32, i32) {
    %c0_i32 = arith.constant 0 : i32
    %c0_i32_0 = arith.constant 0 : i32
    return %arg0, %c0_i32 : i32, i32
  }
  func.func @transform_1(%arg0: i32, %arg1: i32) -> (i32, i32) {
    %c0_i32 = arith.constant 0 : i32
    %c0_i32_0 = arith.constant 0 : i32
    return %arg1, %c0_i32 : i32, i32
  }
  func.func @transform_2(%arg0: i32, %arg1: i32) -> (i32, i32) {
    %c0_i32 = arith.constant 0 : i32
    %c0_i32_0 = arith.constant 0 : i32
    return %c0_i32, %arg1 : i32, i32
  }
  func.func @transform_3(%arg0: i32, %arg1: i32) -> (i32, i32) {
    %c0_i32 = arith.constant 0 : i32
    return %arg0, %arg1 : i32, i32
  }
}

</mosaic_0001>

<llo_original>
// kernel: tpu_custom_call.1
$region0: #{tpu_custom_call.1}
  #allocation0 [shape = 'u32[]', space=smem, size = 0x4, offset = 0x4, fixed_abs, tag = 'smem constant byte address 0x4 - core index']
  #allocation1 [shape = 'u32[144,128]{1,0:T(1,128)}', space=vmem, size = 0x12000, scoped, tag = 'internal scratch']
  %s0 = inlined_call_operand.hbm [shape: f32[2,32], index: 0, kind: input, shape index: {}]
  %s1 = inlined_call_operand.hbm [shape: f32[16,32], index: 1, kind: input, shape index: {}]
  %s2 = inlined_call_operand.vmem [shape: f32[1,16], index: 2, kind: input, shape index: {}]
  %s3 = inlined_call_operand.hbm [shape: f32[2,16], index: 3, kind: output, shape index: {}]
  %s4 = sld [smem:[#allocation0]]
  $region30: #{tpu_custom_call.1} parent=0
    _
  %s6 = ssub.s32 1, %s4
  %s7 = scalar_select 0, %s6, %s4
  $region1: #{tpu_custom_call.1} parent=0
    #allocation2 [shape = 'u8[1024]{0}', space=vmem, size = 0x400, scoped, tag = 'input window, operand 0, single buffered']
    #allocation3 [shape = 's32[1]{0}', space=sflag, size = 0x4, scoped, tag = 'scoped memory for tpu_custom_call.1']
    #allocation4 [shape = 's32[1]{0}', space=sflag, size = 0x4, scoped, tag = 'scoped memory for tpu_custom_call.1']
    #allocation5 [shape = 'u8[8192]{0}', space=vmem, size = 0x2000, scoped, tag = 'input window, operand 1, single buffered']
    #allocation6 [shape = 's32[1]{0}', space=sflag, size = 0x4, scoped, tag = 'scoped memory for tpu_custom_call.1']
    #allocation7 [shape = 'u8[1024]{0}', space=vmem, size = 0x400, scoped, tag = 'output window, operand 0, single buffered']
    %8 = vsyncpa [#allocation3], 0
    %9 = vsyncpa [#allocation6], 0
    %10 = vsyncpa [#allocation4], 0
    // Predicated region
    $region2: #{tpu_custom_call.1} parent=1 // pred_check
      _
    $region3: #{tpu_custom_call.1} parent=1 // pred_check_branch
      %12 = sbr.rel (0) target = $region5
    $region4: #{tpu_custom_call.1} parent=1 // pred_region
      %s14 = ssub.s32 32, 32
      %15 = vsyncadd [#allocation3], %s14
      %s17 = sshll.u32 [#allocation2], 4
      %s18 = int_to_ptr.vmem [resolvable:$true] %s17
      %20 = dma.hbm_to_vmem [thread:$0]  %s0, 32, %s18, [#allocation3]
    $region5: #{tpu_custom_call.1} parent=1 // pred_fallthru
      _
    // Predicated region
    $region6: #{tpu_custom_call.1} parent=1 // pred_check
      _
    $region7: #{tpu_custom_call.1} parent=1 // pred_check_branch
      %22 = sbr.rel (0) target = $region9
    $region8: #{tpu_custom_call.1} parent=1 // pred_region
      %s24 = ssub.s32 256, 256
      %25 = vsyncadd [#allocation6], %s24
      %s26 = sshll.u32 [#allocation5], 4
      %s27 = int_to_ptr.vmem [resolvable:$true] %s26
      %32 = dma.hbm_to_vmem [thread:$0]  %s1, 256, %s27, [#allocation6], 128, 128, 8
    $region9: #{tpu_custom_call.1} parent=1 // pred_fallthru
      _
    // Predicated region
    $region10: #{tpu_custom_call.1} parent=1 // pred_check
      _
    $region11: #{tpu_custom_call.1} parent=1 // pred_check_branch
      %34 = sbr.rel (0) target = $region13
    $region12: #{tpu_custom_call.1} parent=1 // pred_region
      _
    $region13: #{tpu_custom_call.1} parent=1 // pred_fallthru
      _
    // Predicated region
    $region14: #{tpu_custom_call.1} parent=1 // pred_check
      _
    $region15: #{tpu_custom_call.1} parent=1 // pred_check_branch
      %36 = sbr.rel (0) target = $region17
    $region16: #{tpu_custom_call.1} parent=1 // pred_region
      %37 = dma.done [#allocation3], 32
    $region17: #{tpu_custom_call.1} parent=1 // pred_fallthru
      _
    // Predicated region
    $region18: #{tpu_custom_call.1} parent=1 // pred_check
      _
    $region19: #{tpu_custom_call.1} parent=1 // pred_check_branch
      %39 = sbr.rel (0) target = $region21
    $region20: #{tpu_custom_call.1} parent=1 // pred_region
      %40 = dma.done [#allocation6], 256
    $region21: #{tpu_custom_call.1} parent=1 // pred_fallthru
      _
    %v41 = vld [vmem:[#allocation2] sm:$0x3]
    %v42 = vld [vmem:[#allocation5] sm:$0xff]
    %v43 = vld [vmem:[#allocation5 + $0x8] sm:$0xff]
    %v44 = vld [vmem:[%s2] sm:$0x1]
    %v46 = vlaneseq
    %v47 = vshrl.u32 %v46, 7
    %v48 = vsub.s32 0, %v47
    %v49 = vrot.slane %v44, %v48
    %vm51 = vcmask 261120
    %v53 = vsel %vm51, %v41, 0
    %v56 = vsel %vm51, %v42, 0
    %v59 = vsel %vm51, %v43, 0
    %61 = vmatprep.subr.mxu0 0.0
    %62 = vmatpush1.xpose.msra.mxu0 %v56
    %63 = vmatprep.subr.mxu0 0.0
    %64 = vmatpush1.xpose.msra.mxu0 %v59
    %65 = vmatprep.subr.mxu0 0.0
    %66 = vmatpush1.xpose.msra.mxu0 0.0
    %67 = vmatprep.subr.mxu0 0.0
    %68 = vmatpush1.xpose.msra.mxu0 0.0
    %69 = vmatprep.subr.mxu0 0.0
    %70 = vmatpush1.xpose.msra.mxu0 0.0
    %71 = vmatprep.subr.mxu0 0.0
    %72 = vmatpush1.xpose.msra.mxu0 0.0
    %73 = vmatprep.subr.mxu0 0.0
    %74 = vmatpush1.xpose.msra.mxu0 0.0
    %75 = vmatprep.subr.mxu0 0.0
    %76 = vmatpush1.xpose.msra.mxu0 0.0
    %77 = vmatprep.subr.mxu0 0.0
    %78 = vmatpush1.xpose.msra.mxu0 0.0
    %79 = vmatprep.subr.mxu0 0.0
    %80 = vmatpush1.xpose.msra.mxu0 0.0
    %81 = vmatprep.subr.mxu0 0.0
    %82 = vmatpush1.xpose.msra.mxu0 0.0
    %83 = vmatprep.subr.mxu0 0.0
    %84 = vmatpush1.xpose.msra.mxu0 0.0
    %85 = vmatprep.subr.mxu0 0.0
    %86 = vmatpush1.xpose.msra.mxu0 0.0
    %87 = vmatprep.subr.mxu0 0.0
    %88 = vmatpush1.xpose.msra.mxu0 0.0
    %89 = vmatprep.subr.mxu0 0.0
    %90 = vmatpush1.xpose.msra.mxu0 0.0
    %91 = vmatprep.subr.mxu0 0.0
    %92 = vmatpush1.xpose.msra.mxu0 0.0
    %93 = vmatprep.subr.mxu0 0.0
    %94 = vmatpush1.xpose.msra.mxu0 0.0
    %95 = vmatprep.subr.mxu0 0.0
    %96 = vmatpush1.xpose.msra.mxu0 0.0
    %97 = vmatprep.subr.mxu0 0.0
    %98 = vmatpush1.xpose.msra.mxu0 0.0
    %99 = vmatprep.subr.mxu0 0.0
    %100 = vmatpush1.xpose.msra.mxu0 0.0
    %101 = vmatprep.subr.mxu0 0.0
    %102 = vmatpush1.xpose.msra.mxu0 0.0
    %103 = vmatprep.subr.mxu0 0.0
    %104 = vmatpush1.xpose.msra.mxu0 0.0
    %105 = vmatprep.subr.mxu0 0.0
    %106 = vmatpush1.xpose.msra.mxu0 0.0
    %107 = vmatprep.subr.mxu0 0.0
    %108 = vmatpush1.xpose.msra.mxu0 0.0
    %109 = vmatprep.subr.mxu0 0.0
    %110 = vmatpush1.xpose.msra.mxu0 0.0
    %111 = vmatprep.subr.mxu0 0.0
    %112 = vmatpush1.xpose.msra.mxu0 0.0
    %113 = vmatprep.subr.mxu0 0.0
    %114 = vmatpush1.xpose.msra.mxu0 0.0
    %115 = vmatprep.subr.mxu0 0.0
    %116 = vmatpush1.xpose.msra.mxu0 0.0
    %117 = vmatprep.subr.mxu0 0.0
    %118 = vmatpush1.xpose.msra.mxu0 0.0
    %119 = vmatprep.subr.mxu0 0.0
    %120 = vmatpush1.xpose.msra.mxu0 0.0
    %121 = vmatprep.subr.mxu0 0.0
    %122 = vmatpush1.xpose.msra.mxu0 0.0
    %123 = vmatprep.subr.mxu0 0.0
    %124 = vmatpush1.xpose.msra.mxu0 0.0
    %125 = vmatprep.mubr.f32.mxu0 0.0
    %126 = vmatmul.mubr.f32.gmra.mrb[0].mxu0 %v53
    %v127 = vpop.f32.mrb[0].mxu0
    %v128 = vadd.f32 %v49, %v127
    %v129 = vpop.f32.mrb[0].mxu0
    %130 = vdwg.mxu0
    %vm131 = vcmask 123904
    %132 = vst.msk [vmem:[#allocation7] sm:$0x3] %vm131, %v128
    // Predicated region
    $region22: #{tpu_custom_call.1} parent=1 // pred_check
      _
    $region23: #{tpu_custom_call.1} parent=1 // pred_check_branch
      %134 = sbr.rel (0) target = $region25
    $region24: #{tpu_custom_call.1} parent=1 // pred_region
      %s136 = ssub.s32 32, 32
      %137 = vsyncadd [#allocation4], %s136
      %s139 = sshll.u32 [#allocation7], 4
      %s140 = int_to_ptr.vmem [resolvable:$true] %s139
      %142 = dma.vmem_to_hbm [thread:$0]  %s140, 32, %s3, [#allocation4]
    $region25: #{tpu_custom_call.1} parent=1 // pred_fallthru
      _
    // Predicated region
    $region26: #{tpu_custom_call.1} parent=1 // pred_check
      _
    $region27: #{tpu_custom_call.1} parent=1 // pred_check_branch
      %144 = sbr.rel (0) target = $region29
    $region28: #{tpu_custom_call.1} parent=1 // pred_region
      %145 = dma.done [#allocation4], 32
    $region29: #{tpu_custom_call.1} parent=1 // pred_fallthru
      _
    %146 = vsyncpa [#allocation3], 1
    %147 = vsyncpa [#allocation6], 1
    %148 = vsyncpa [#allocation4], 1

</llo_original>
